<compile_context>
chip_gen: v5e
topology: v5e:2x2
jax: 0.10.0
libtpu: 0.0.40
codegen_flags: <defaults>
</compile_context>

<pallas_src>
import math

import jax
import jax.numpy as jnp
from jax.experimental import pallas as pl
from jax.experimental.pallas import tpu as pltpu

D_MODEL = 64
H_W = 16   # weight-hypernet hidden width
H_B = 12   # bias-hypernet hidden width

_VMEM = pl.BlockSpec(memory_space=pltpu.MemorySpace.VMEM)


# ----------------------------------------------------------------------------
# Hot-path Pallas kernel: 4 matmuls + tanh/sigmoid.  All generated weights are
# precomputed constants; biases are packed into one (4, >=128) slab.
# ----------------------------------------------------------------------------
def _policy_kernel(x_ref, w_in_ref, m1_ref, m2_ref, w_out_ref, bias_ref, o_ref):
    nout = o_ref.shape[1]
    b_in = bias_ref[0:1, 0:80]        # InputVnnBlock generated bias
    c1 = bias_ref[1:2, 0:50]          # mid_nn Linear(80,50) bias
    c2 = bias_ref[2:3, 0:30]          # mid_nn Linear(50,30) bias
    b_out = bias_ref[3:4, 0:nout]     # OutputVnnBlock generated bias

    # InputVnnBlock(x, 80) + Policy's tanh
    y = jnp.tanh(
        jnp.dot(x_ref[...], w_in_ref[...], preferred_element_type=jnp.float32) + b_in)
    # mid_nn: Linear(80,50) -> Tanh -> Linear(50,30) -> Tanh
    y = jnp.tanh(
        jnp.dot(y, m1_ref[...], preferred_element_type=jnp.float32) + c1)
    y = jnp.tanh(
        jnp.dot(y, m2_ref[...], preferred_element_type=jnp.float32) + c2)
    # OutputVnnBlock(., output_size) -> sigmoid + 0.6
    z = jnp.dot(y, w_out_ref[...], preferred_element_type=jnp.float32) + b_out
    o_ref[...] = jax.nn.sigmoid(z) + 0.6


# ----------------------------------------------------------------------------
# Plain-JAX glue: positional encodings, param init, hoisted hypernet eval
# ----------------------------------------------------------------------------
def sinusoidal_pe(n, d_model):
    pos = jnp.arange(n, dtype=jnp.float32)[:, None]
    idx = jnp.arange(0, d_model, 2, dtype=jnp.float32)
    div = jnp.exp(-math.log(10000.0) * idx / d_model)
    ang = pos * div[None, :]
    pe = jnp.zeros((n, d_model), jnp.float32)
    pe = pe.at[:, 0::2].set(jnp.sin(ang))
    pe = pe.at[:, 1::2].set(jnp.cos(ang))
    return pe


def linear_init(key, fan_in, fan_out):
    """PyTorch nn.Linear default init: U(-1/sqrt(fan_in), 1/sqrt(fan_in))."""
    kw, kb = jax.random.split(key)
    bound = 1.0 / math.sqrt(fan_in)
    w = jax.random.uniform(kw, (fan_in, fan_out), jnp.float32, -bound, bound)
    b = jax.random.uniform(kb, (1, fan_out), jnp.float32, -bound, bound)
    return w, b


def init_policy_params(key):
    ks = jax.random.split(key, 6)
    w1, b1 = linear_init(ks[0], 2 * D_MODEL + 1, H_W)   # weight_model Linear(129,16)
    w2, b2 = linear_init(ks[1], H_W, 1)                 # weight_model Linear(16,1)
    bw1, bb1 = linear_init(ks[2], D_MODEL + 1, H_B)     # bias_model Linear(65,12)
    bw2, bb2 = linear_init(ks[3], H_B, 1)               # bias_model Linear(12,1)
    return {
        "w_hyper": (w1, b1, w2, b2),
        "b_hyper": (bw1, bb1, bw2, bb2),
        "mid1": linear_init(ks[4], 80, 50),
        "mid2": linear_init(ks[5], 50, 30),
    }


def _generate_vnn_weight_bias(params, in_size, out_size):
    """Evaluate the VNNBlock hypernet once (plain JAX, runs at constant-build
    time only): W is (in_size, out_size), bias is (1, out_size)."""
    hp = jax.lax.Precision.HIGHEST
    w1, b1, w2, b2 = params["w_hyper"]
    bw1, bb1, bw2, bb2 = params["b_hyper"]

    pe_i = sinusoidal_pe(in_size, D_MODEL)
    pe_o = sinusoidal_pe(out_size, D_MODEL)
    fi = jnp.repeat(pe_i, out_size, axis=0)
    fo = jnp.tile(pe_o, (in_size, 1))
    ones = jnp.ones((in_size * out_size, 1), jnp.float32)
    wf = jnp.concatenate([fi, fo, ones], axis=1)                 # (in*out, 129)
    h = jnp.tanh(jnp.dot(wf, w1, precision=hp) + b1)
    w = (jnp.dot(h, w2, precision=hp) + b2).reshape(in_size, out_size)

    bf = jnp.concatenate([pe_o, jnp.ones((out_size, 1), jnp.float32)], axis=1)
    hb = jnp.tanh(jnp.dot(bf, bw1, precision=hp) + bb1)
    b = (jnp.dot(hb, bw2, precision=hp) + bb2).reshape(1, out_size)
    return w, b


def build_policy_constants(params, in_features, output_size):
    """Hoisted once per (params, in_features, output_size): generated VNN
    weights/biases + mid_nn weights + packed bias slab."""
    m1, c1 = params["mid1"]
    m2, c2 = params["mid2"]

    w_in, b_in = _generate_vnn_weight_bias(params, in_features, 80)
    w_out, b_out = _generate_vnn_weight_bias(params, 30, output_size)

    lanes = max(128, output_size)
    bias_pack = jnp.zeros((4, lanes), jnp.float32)
    bias_pack = bias_pack.at[0, :80].set(b_in[0])
    bias_pack = bias_pack.at[1, :50].set(c1[0])
    bias_pack = bias_pack.at[2, :30].set(c2[0])
    bias_pack = bias_pack.at[3, :output_size].set(b_out[0])

    consts = (w_in, m1, m2, w_out, bias_pack)
    return tuple(jnp.asarray(a, jnp.float32) for a in consts)


def policy_forward(x, consts):
    w_in, m1, m2, w_out, bias_pack = consts
    batch = x.shape[0]
    output_size = w_out.shape[1]
    return pl.pallas_call(
        _policy_kernel,
        out_shape=jax.ShapeDtypeStruct((batch, output_size), jnp.float32),
        in_specs=[_VMEM] * 6,
        out_specs=_VMEM,
    )(x, w_in, m1, m2, w_out, bias_pack)


# ----------------------------------------------------------------------------
# Pure-JAX reference (Kronecker-expanded hypernet) for validation
# ----------------------------------------------------------------------------
def _reference_forward(x, output_size, params):
    hp = jax.lax.Precision.HIGHEST
    m1, c1 = params["mid1"]
    m2, c2 = params["mid2"]
    w_in, b_in = _generate_vnn_weight_bias(params, x.shape[1], 80)
    w_out, b_out = _generate_vnn_weight_bias(params, 30, output_size)
    y = jnp.tanh(jnp.dot(x, w_in, precision=hp) + b_in)
    y = jnp.tanh(jnp.dot(y, m1, precision=hp) + c1)
    y = jnp.tanh(jnp.dot(y, m2, precision=hp) + c2)
    return jax.nn.sigmoid(jnp.dot(y, w_out, precision=hp) + b_out) + 0.6


# ----------------------------------------------------------------------------
if __name__ == "__main__":
    key = jax.random.PRNGKey(0)
    k_params, k_x = jax.random.split(key)

    batch, in_features, output_size = 2, 10, 6

    params = init_policy_params(k_params)
    consts = build_policy_constants(params, in_features, output_size)
    x = jax.random.normal(k_x, (batch, in_features), dtype=jnp.float32)

    out = policy_forward(x, consts)
    out = jax.block_until_ready(out)

    assert out.shape == (batch, output_size)
    assert out.dtype == jnp.float32
    assert bool(jnp.all(jnp.isfinite(out)))
    # sigmoid(.) + 0.6 must lie in [0.6, 1.6] (inclusive: fp32 sigmoid saturates)
    assert bool(jnp.all((out >= 0.6) & (out <= 1.6)))

    # Validate the hoisted-constant kernel against the pure-JAX reference.
    ref = _reference_forward(x, output_size, params)
    assert bool(jnp.allclose(out, ref, atol=2e-3, rtol=2e-3))

    print("KERNEL_OK")
</pallas_src>

<mosaic_0001>
module attributes {stable_mosaic.version = 11 : i64} {
  func.func @_policy_kernel(%arg0: memref<2x10xf32, #tpu.memory_space<vmem>>, %arg1: memref<10x80xf32, #tpu.memory_space<vmem>>, %arg2: memref<80x50xf32, #tpu.memory_space<vmem>>, %arg3: memref<50x30xf32, #tpu.memory_space<vmem>>, %arg4: memref<30x6xf32, #tpu.memory_space<vmem>>, %arg5: memref<4x128xf32, #tpu.memory_space<vmem>>, %arg6: memref<2x6xf32, #tpu.memory_space<vmem>>) attributes {dimension_semantics = [], scalar_prefetch = 0 : i64, scratch_operands = 0 : i64, tpu.core_type = #tpu.core_type<tc>} {
    %c0 = arith.constant 0 : index
    %c0_0 = arith.constant 0 : index
    %0 = vector.load %arg5[%c0, %c0_0] : memref<4x128xf32, #tpu.memory_space<vmem>>, vector<1x80xf32>
    %c1 = arith.constant 1 : index
    %c0_1 = arith.constant 0 : index
    %1 = vector.load %arg5[%c1, %c0_1] : memref<4x128xf32, #tpu.memory_space<vmem>>, vector<1x50xf32>
    %c2 = arith.constant 2 : index
    %c0_2 = arith.constant 0 : index
    %2 = vector.load %arg5[%c2, %c0_2] : memref<4x128xf32, #tpu.memory_space<vmem>>, vector<1x30xf32>
    %c3 = arith.constant 3 : index
    %c0_3 = arith.constant 0 : index
    %3 = vector.load %arg5[%c3, %c0_3] : memref<4x128xf32, #tpu.memory_space<vmem>>, vector<1x6xf32>
    %c0_4 = arith.constant 0 : index
    %c0_5 = arith.constant 0 : index
    %4 = vector.load %arg0[%c0_4, %c0_5] : memref<2x10xf32, #tpu.memory_space<vmem>>, vector<2x10xf32>
    %c0_6 = arith.constant 0 : index
    %c0_7 = arith.constant 0 : index
    %5 = vector.load %arg1[%c0_6, %c0_7] : memref<10x80xf32, #tpu.memory_space<vmem>>, vector<10x80xf32>
    %cst = arith.constant dense<0.000000e+00> : vector<2x80xf32>
    %6 = tpu.matmul %4, %5, %cst {dimension_numbers = #tpu.dot_dimension_numbers<[1], [0], [0], [1], [0, 0, 1, 1], [], []>} : vector<2x10xf32>, vector<10x80xf32>, vector<2x80xf32> -> vector<2x80xf32>
    %7 = vector.broadcast %0 : vector<1x80xf32> to vector<2x80xf32>
    %8 = arith.addf %6, %7 : vector<2x80xf32>
    %9 = math.tanh %8 : vector<2x80xf32>
    %c0_8 = arith.constant 0 : index
    %c0_9 = arith.constant 0 : index
    %10 = vector.load %arg2[%c0_8, %c0_9] : memref<80x50xf32, #tpu.memory_space<vmem>>, vector<80x50xf32>
    %cst_10 = arith.constant dense<0.000000e+00> : vector<2x50xf32>
    %11 = tpu.matmul %9, %10, %cst_10 {dimension_numbers = #tpu.dot_dimension_numbers<[1], [0], [0], [1], [0, 0, 1, 1], [], []>} : vector<2x80xf32>, vector<80x50xf32>, vector<2x50xf32> -> vector<2x50xf32>
    %12 = vector.broadcast %1 : vector<1x50xf32> to vector<2x50xf32>
    %13 = arith.addf %11, %12 : vector<2x50xf32>
    %14 = math.tanh %13 : vector<2x50xf32>
    %c0_11 = arith.constant 0 : index
    %c0_12 = arith.constant 0 : index
    %15 = vector.load %arg3[%c0_11, %c0_12] : memref<50x30xf32, #tpu.memory_space<vmem>>, vector<50x30xf32>
    %cst_13 = arith.constant dense<0.000000e+00> : vector<2x30xf32>
    %16 = tpu.matmul %14, %15, %cst_13 {dimension_numbers = #tpu.dot_dimension_numbers<[1], [0], [0], [1], [0, 0, 1, 1], [], []>} : vector<2x50xf32>, vector<50x30xf32>, vector<2x30xf32> -> vector<2x30xf32>
    %17 = vector.broadcast %2 : vector<1x30xf32> to vector<2x30xf32>
    %18 = arith.addf %16, %17 : vector<2x30xf32>
    %19 = math.tanh %18 : vector<2x30xf32>
    %c0_14 = arith.constant 0 : index
    %c0_15 = arith.constant 0 : index
    %20 = vector.load %arg4[%c0_14, %c0_15] : memref<30x6xf32, #tpu.memory_space<vmem>>, vector<30x6xf32>
    %cst_16 = arith.constant dense<0.000000e+00> : vector<2x6xf32>
    %21 = tpu.matmul %19, %20, %cst_16 {dimension_numbers = #tpu.dot_dimension_numbers<[1], [0], [0], [1], [0, 0, 1, 1], [], []>} : vector<2x30xf32>, vector<30x6xf32>, vector<2x6xf32> -> vector<2x6xf32>
    %22 = vector.broadcast %3 : vector<1x6xf32> to vector<2x6xf32>
    %23 = arith.addf %21, %22 : vector<2x6xf32>
    %24 = arith.negf %23 : vector<2x6xf32>
    %25 = math.exp %24 : vector<2x6xf32>
    %cst_17 = arith.constant 1.000000e+00 : f32
    %26 = vector.broadcast %cst_17 : f32 to vector<2x6xf32>
    %27 = arith.addf %26, %25 : vector<2x6xf32>
    %28 = arith.divf %26, %27 : vector<2x6xf32>
    %cst_18 = arith.constant 6.000000e-01 : f32
    %29 = vector.broadcast %cst_18 : f32 to vector<2x6xf32>
    %30 = arith.addf %28, %29 : vector<2x6xf32>
    %c0_19 = arith.constant 0 : index
    %c0_20 = arith.constant 0 : index
    %31 = vector.load %arg6[%c0_19, %c0_20] : memref<2x6xf32, #tpu.memory_space<vmem>>, vector<2x6xf32>
    tpu.vector_store %arg6[%c0_19, %c0_20], %30 {strides = array<i32>} : memref<2x6xf32, #tpu.memory_space<vmem>>, vector<2x6xf32>,
    return
  }
}

</mosaic_0001>

<llo_original>
// kernel: tpu_custom_call.1
$region0: #{tpu_custom_call.1}
  #allocation0 [shape = 'u32[]', space=smem, size = 0x4, offset = 0x4, fixed_abs, tag = 'smem constant byte address 0x4 - core index']
  #allocation1 [shape = 'u32[72,128]{1,0:T(1,128)}', space=vmem, size = 0x9000, scoped, tag = 'internal scratch']
  %s0 = inlined_call_operand.vmem [shape: f32[2,10], index: 0, kind: input, shape index: {}]
  %s1 = inlined_call_operand.vmem [shape: f32[10,80], index: 1, kind: input, shape index: {}]
  %s2 = inlined_call_operand.vmem [shape: f32[80,50], index: 2, kind: input, shape index: {}]
  %s3 = inlined_call_operand.vmem [shape: f32[50,30], index: 3, kind: input, shape index: {}]
  %s4 = inlined_call_operand.vmem [shape: f32[30,6], index: 4, kind: input, shape index: {}]
  %s5 = inlined_call_operand.vmem [shape: f32[4,128], index: 5, kind: input, shape index: {}]
  %s6 = inlined_call_operand.hbm [shape: f32[2,6], index: 6, kind: output, shape index: {}]
  %s7 = sld [smem:[#allocation0]]
  $region34: #{tpu_custom_call.1} parent=0
    _
  %s9 = ssub.s32 1, %s7
  %s10 = scalar_select 0, %s9, %s7
  $region1: #{tpu_custom_call.1} parent=0
    #allocation2 [shape = 'u8[1024]{0}', space=vmem, size = 0x400, scoped, tag = 'output window, operand 0, single buffered']
    #allocation3 [shape = 's32[1]{0}', space=sflag, size = 0x4, scoped, tag = 'scoped memory for tpu_custom_call.1']
    %11 = vsyncpa [#allocation3], 0
    // Predicated region
    $region2: #{tpu_custom_call.1} parent=1 // pred_check
      _
    $region3: #{tpu_custom_call.1} parent=1 // pred_check_branch
      %13 = sbr.rel (0) target = $region5
    $region4: #{tpu_custom_call.1} parent=1 // pred_region
      _
    $region5: #{tpu_custom_call.1} parent=1 // pred_fallthru
      _
    // Predicated region
    $region6: #{tpu_custom_call.1} parent=1 // pred_check
      _
    $region7: #{tpu_custom_call.1} parent=1 // pred_check_branch
      %15 = sbr.rel (0) target = $region9
    $region8: #{tpu_custom_call.1} parent=1 // pred_region
      _
    $region9: #{tpu_custom_call.1} parent=1 // pred_fallthru
      _
    // Predicated region
    $region10: #{tpu_custom_call.1} parent=1 // pred_check
      _
    $region11: #{tpu_custom_call.1} parent=1 // pred_check_branch
      %17 = sbr.rel (0) target = $region13
    $region12: #{tpu_custom_call.1} parent=1 // pred_region
      _
    $region13: #{tpu_custom_call.1} parent=1 // pred_fallthru
      _
    // Predicated region
    $region14: #{tpu_custom_call.1} parent=1 // pred_check
      _
    $region15: #{tpu_custom_call.1} parent=1 // pred_check_branch
      %19 = sbr.rel (0) target = $region17
    $region16: #{tpu_custom_call.1} parent=1 // pred_region
      _
    $region17: #{tpu_custom_call.1} parent=1 // pred_fallthru
      _
    // Predicated region
    $region18: #{tpu_custom_call.1} parent=1 // pred_check
      _
    $region19: #{tpu_custom_call.1} parent=1 // pred_check_branch
      %21 = sbr.rel (0) target = $region21
    $region20: #{tpu_custom_call.1} parent=1 // pred_region
      _
    $region21: #{tpu_custom_call.1} parent=1 // pred_fallthru
      _
    // Predicated region
    $region22: #{tpu_custom_call.1} parent=1 // pred_check
      _
    $region23: #{tpu_custom_call.1} parent=1 // pred_check_branch
      %23 = sbr.rel (0) target = $region25
    $region24: #{tpu_custom_call.1} parent=1 // pred_region
      _
    $region25: #{tpu_custom_call.1} parent=1 // pred_fallthru
      _
    %v24 = vld [vmem:[%s5] sm:$0x1]
    %v25 = vld [vmem:[%s5 + $0x1] sm:$0x1]
    %v26 = vld [vmem:[%s5 + $0x2] sm:$0x1]
    %v27 = vld [vmem:[%s5 + $0x3] sm:$0x1]
    %v28 = vld [vmem:[%s0] sm:$0x3]
    %v29 = vld [vmem:[%s1] sm:$0xff]
    %v30 = vld [vmem:[%s1 + $0x8] sm:$0x3]
    %v31 = vperm.slane %v24, 0
    %vm32 = vcmask 80896
    %v34 = vsel %vm32, %v28, 0
    %vm36 = vcmask 1041408
    %v38 = vsel %vm36, %v30, 0
    %40 = vmatpush.msra.mxu0 0.0
    %41 = vmatpush.msra.mxu0 0.0
    %42 = vmatpush.msra.mxu0 0.0
    %43 = vmatpush.msra.mxu0 0.0
    %44 = vmatpush.msra.mxu0 0.0
    %45 = vmatpush.msra.mxu0 0.0
    %46 = vmatpush.msra.mxu0 0.0
    %47 = vmatpush.msra.mxu0 0.0
    %48 = vmatpush.msra.mxu0 0.0
    %49 = vmatpush.msra.mxu0 0.0
    %50 = vmatpush.msra.mxu0 0.0
    %51 = vmatpush.msra.mxu0 0.0
    %52 = vmatpush.msra.mxu0 0.0
    %53 = vmatpush.msra.mxu0 0.0
    %54 = vmatpush.msra.mxu0 %v38
    %55 = vmatpush.msra.mxu0 %v29
    %56 = vmatmul.f32.gmra.mxu0 %v34
    %v57 = vpop.f32.mrf.mxu0
    %v58 = vadd.f32 %v31, %v57
    %59 = vdwg.mxu0
    %v60 = vtanh.pop %v58
    %v61 = vld [vmem:[%s2] sm:$0xff]
    %v62 = vld [vmem:[%s2 + $0x8] sm:$0xff]
    %v63 = vld [vmem:[%s2 + $0x10] sm:$0xff]
    %v64 = vld [vmem:[%s2 + $0x18] sm:$0xff]
    %v65 = vld [vmem:[%s2 + $0x20] sm:$0xff]
    %v66 = vld [vmem:[%s2 + $0x28] sm:$0xff]
    %v67 = vld [vmem:[%s2 + $0x30] sm:$0xff]
    %v68 = vld [vmem:[%s2 + $0x38] sm:$0xff]
    %v69 = vld [vmem:[%s2 + $0x40] sm:$0xff]
    %v70 = vld [vmem:[%s2 + $0x48] sm:$0xff]
    %v71 = vperm.slane %v25, 0
    %vm72 = vcmask 654336
    %v74 = vsel %vm72, %v60, 0
    %76 = vmatpush.msra.mxu0 0.0
    %77 = vmatpush.msra.mxu0 0.0
    %78 = vmatpush.msra.mxu0 0.0
    %79 = vmatpush.msra.mxu0 0.0
    %80 = vmatpush.msra.mxu0 0.0
    %81 = vmatpush.msra.mxu0 0.0
    %82 = vmatpush.msra.mxu0 %v70
    %83 = vmatpush.msra.mxu0 %v69
    %84 = vmatpush.msra.mxu0 %v68
    %85 = vmatpush.msra.mxu0 %v67
    %86 = vmatpush.msra.mxu0 %v66
    %87 = vmatpush.msra.mxu0 %v65
    %88 = vmatpush.msra.mxu0 %v64
    %89 = vmatpush.msra.mxu0 %v63
    %90 = vmatpush.msra.mxu0 %v62
    %91 = vmatpush.msra.mxu0 %v61
    %92 = vmatmul.f32.gmra.mxu0 %v74
    %v93 = vpop.f32.mrf.mxu0
    %v94 = vadd.f32 %v71, %v93
    %95 = vdwg.mxu0
    %v96 = vtanh.pop %v94
    %v97 = vld [vmem:[%s3] sm:$0xff]
    %v98 = vld [vmem:[%s3 + $0x8] sm:$0xff]
    %v99 = vld [vmem:[%s3 + $0x10] sm:$0xff]
    %v100 = vld [vmem:[%s3 + $0x18] sm:$0xff]
    %v101 = vld [vmem:[%s3 + $0x20] sm:$0xff]
    %v102 = vld [vmem:[%s3 + $0x28] sm:$0xff]
    %v103 = vld [vmem:[%s3 + $0x30] sm:$0x3]
    %v104 = vperm.slane %v26, 0
    %vm105 = vcmask 408576
    %v107 = vsel %vm105, %v96, 0
    %v110 = vsel %vm36, %v103, 0
    %112 = vmatpush.msra.mxu0 0.0
    %113 = vmatpush.msra.mxu0 0.0
    %114 = vmatpush.msra.mxu0 0.0
    %115 = vmatpush.msra.mxu0 0.0
    %116 = vmatpush.msra.mxu0 0.0
    %117 = vmatpush.msra.mxu0 0.0
    %118 = vmatpush.msra.mxu0 0.0
    %119 = vmatpush.msra.mxu0 0.0
    %120 = vmatpush.msra.mxu0 0.0
    %121 = vmatpush.msra.mxu0 %v110
    %122 = vmatpush.msra.mxu0 %v102
    %123 = vmatpush.msra.mxu0 %v101
    %124 = vmatpush.msra.mxu0 %v100
    %125 = vmatpush.msra.mxu0 %v99
    %126 = vmatpush.msra.mxu0 %v98
    %127 = vmatpush.msra.mxu0 %v97
    %128 = vmatmul.f32.gmra.mxu0 %v107
    %v129 = vpop.f32.mrf.mxu0
    %v130 = vadd.f32 %v104, %v129
    %131 = vdwg.mxu0
    %v132 = vtanh.pop %v130
    %v133 = vld [vmem:[%s4] sm:$0xff]
    %v134 = vld [vmem:[%s4 + $0x8] sm:$0xff]
    %v135 = vld [vmem:[%s4 + $0x10] sm:$0xff]
    %v136 = vld [vmem:[%s4 + $0x18] sm:$0x3f]
    %v137 = vperm.slane %v27, 0
    %vm138 = vcmask 244736
    %v140 = vsel %vm138, %v132, 0
    %vm142 = vcmask 1045504
    %v144 = vsel %vm142, %v136, 0
    %146 = vmatpush.msra.mxu0 0.0
    %147 = vmatpush.msra.mxu0 0.0
    %148 = vmatpush.msra.mxu0 0.0
    %149 = vmatpush.msra.mxu0 0.0
    %150 = vmatpush.msra.mxu0 0.0
    %151 = vmatpush.msra.mxu0 0.0
    %152 = vmatpush.msra.mxu0 0.0
    %153 = vmatpush.msra.mxu0 0.0
    %154 = vmatpush.msra.mxu0 0.0
    %155 = vmatpush.msra.mxu0 0.0
    %156 = vmatpush.msra.mxu0 0.0
    %157 = vmatpush.msra.mxu0 0.0
    %158 = vmatpush.msra.mxu0 %v144
    %159 = vmatpush.msra.mxu0 %v135
    %160 = vmatpush.msra.mxu0 %v134
    %161 = vmatpush.msra.mxu0 %v133
    %162 = vmatmul.f32.gmra.mxu0 %v140
    %v163 = vpop.f32.mrf.mxu0
    %v164 = vadd.f32 %v137, %v163
    %165 = vdwg.mxu0
    %v166 = vxor.u32 %v164, 2147483648
    %v167 = vmul.f32 %v166, 1.442695
    %v168 = vpow.pop %v167
    %v169 = vadd.f32 %v168, 1.0
    %v170 = vrcp.pop %v169
    %v171 = vmul.f32 %v169, %v170
    %v172 = vsub.f32 1.0, %v171
    %v173 = vmul.f32 %v170, %v172
    %v174 = vadd.f32 %v170, %v173
    %vm175 = vweird.f32 %v169
    %vm176 = vweird.f32 %v170
    %vm177 = vmor %vm175, %vm176
    %v178 = vsel %vm177, %v170, %v174
    %v179 = vand.u32 2147483647, %v169
    %vm180 = vcmp.eq.f32.partialorder %v179, 8.507059e+37
    %v181 = vand.u32 %v169, 2147483648
    %v182 = vor.u32 1.1754944e-38, %v181
    %v183 = vsel %vm180, %v182, %v178
    %v184 = vmul.f32 1.0, %v183
    %v185 = vadd.f32 %v184, 0.6
    %vm186 = vcmask 41984
    %187 = vst.msk [vmem:[#allocation2] sm:$0x3] %vm186, %v185
    // Predicated region
    $region26: #{tpu_custom_call.1} parent=1 // pred_check
      _
    $region27: #{tpu_custom_call.1} parent=1 // pred_check_branch
      %189 = sbr.rel (0) target = $region29
    $region28: #{tpu_custom_call.1} parent=1 // pred_region
      %191 = vsyncadd [#allocation3], 0
      %s193 = sshll.u32 [#allocation2], 4
      %s194 = int_to_ptr.vmem [resolvable:$true] %s193
      %s195 = sshll.u32 %s6, 4
      %s196 = int_to_ptr.hbm [resolvable:$true] %s195
      %198 = dma.vmem_to_hbm [thread:$0]  %s194, 32, %s196, [#allocation3]
    $region29: #{tpu_custom_call.1} parent=1 // pred_fallthru
      _
    // Predicated region
    $region30: #{tpu_custom_call.1} parent=1 // pred_check
      _
    $region31: #{tpu_custom_call.1} parent=1 // pred_check_branch
      %200 = sbr.rel (0) target = $region33
    $region32: #{tpu_custom_call.1} parent=1 // pred_region
      %202 = dma.done [#allocation3], 32
    $region33: #{tpu_custom_call.1} parent=1 // pred_fallthru
      _
    %203 = vsyncpa [#allocation3], 1

</llo_original>
